<compile_context>
chip_gen: v6e
topology: v6e:2x2x1
jax: 0.10.0
libtpu: 0.0.40
codegen_flags: <defaults>
</compile_context>

<pallas_src>
import jax
import jax.numpy as jnp
from jax.experimental import pallas as pl
from jax.experimental.pallas import tpu as pltpu


def _round_up(x, m):
    return (x + m - 1) // m * m


# --------------------------------------------------------------------------
# Kernels
# --------------------------------------------------------------------------
def _linear_relu_kernel_fused(x_ref, w_ref, b_ref, o_ref):
    """Single-K-block path: one MXU matmul + bias + ReLU per output tile."""
    acc = jnp.dot(x_ref[...], w_ref[...], preferred_element_type=jnp.float32)
    o_ref[...] = jnp.maximum(acc + b_ref[...], 0.0).astype(o_ref.dtype)


def _linear_relu_kernel_ktiled(x_ref, w_ref, b_ref, o_ref, acc_ref):
    """K-tiled path: f32 VMEM accumulator, bias folded into the k==0 init."""
    k = pl.program_id(2)

    @pl.when(k == 0)
    def _init():
        acc_ref[...] = jnp.broadcast_to(b_ref[...], acc_ref.shape).astype(jnp.float32)

    acc_ref[...] += jnp.dot(
        x_ref[...], w_ref[...], preferred_element_type=jnp.float32
    )

    @pl.when(k == pl.num_programs(2) - 1)
    def _finalize():
        o_ref[...] = jnp.maximum(acc_ref[...], 0.0).astype(o_ref.dtype)


# --------------------------------------------------------------------------
# Wrapper
# --------------------------------------------------------------------------
def _vmem_budget_bytes():
    """Generation-aware VMEM budget (bytes) for tile selection."""
    phys = 64 * 1024 * 1024
    try:
        info = pltpu.get_tpu_info()
        phys = int(getattr(info, "vmem_capacity_bytes", phys))
    except Exception:
        pass
    if phys >= 96 * 1024 * 1024:      # v5e / v6e: 128 MiB physical
        return 96 * 1024 * 1024
    return 44 * 1024 * 1024           # v7x: 64 MiB physical, keep Mosaic headroom


@jax.jit
def linear_forward(x, weight, bias):
    """x: (bz, seq_len, input_size) -> ReLU(x @ W + b): (bz, seq_len, output_size)."""
    bz, seq_len, K = x.shape
    N = weight.shape[1]

    x2d = x.reshape(-1, K)                       # (M, K) — glue reshape in plain JAX
    M = x2d.shape[0]

    out_dtype = x.dtype
    out_isz = jnp.dtype(out_dtype).itemsize
    compute_dtype = jnp.bfloat16                 # MXU-native; f32 accumulation below
    csize = jnp.dtype(compute_dtype).itemsize

    budget = _vmem_budget_bytes()

    # ---- N tiling: lane-dense (multiple of 128) unless N itself is tiny ----
    if N % 128 == 0 or N < 128:
        Np = N
    else:
        Np = _round_up(N, 128)

    if Np < 128:
        tn_cands = [Np]
    else:
        tn_cands = [Np] + [t for t in (1024, 512, 256, 128) if t < Np and Np % t == 0]

    # ---- M tiling ----
    M8 = _round_up(M, 8)
    tm = M8 if M8 <= 1024 else 512

    def _fits(tm_, tk_, tn_, k_tiled):
        b = 2 * (tm_ * tk_ + tk_ * tn_) * csize      # x & W tiles, double-buffered
        b += 2 * tn_ * 4                             # f32 bias row, double-buffered
        b += 2 * tm_ * tn_ * out_isz                 # output tile, double-buffered
        if k_tiled:
            b += tm_ * tn_ * 4                       # f32 accumulator scratch
        return b, b <= budget

    # ---- Pick tiles: prefer single-K block (no acc RMW), widest lane-dense tn ----
    chosen = None
    for tn_c in tn_cands:                            # 1) single K block
        fb, ok = _fits(tm, K, tn_c, k_tiled=False)
        if ok:
            chosen = (tm, K, tn_c, False, fb)
            break
    if chosen is None:                               # 2) K-tiled for very large K
        for tn_c in tn_cands:
            for tk_c in (2048, 1024, 512, 256, 128):
                if tk_c > _round_up(K, 128):
                    continue
                fb, ok = _fits(tm, tk_c, tn_c, k_tiled=True)
                if ok:
                    chosen = (tm, tk_c, tn_c, True, fb)
                    break
            if chosen is not None:
                break
    if chosen is None:                               # 3) conservative fallback
        tm = min(tm, 256)
        tn_c = Np if Np < 128 else 128
        fb, _ = _fits(tm, 128, tn_c, k_tiled=True)
        chosen = (tm, 128, tn_c, True, fb)

    tm, tk, tn, k_tiled, tile_bytes = chosen

    # ---- v7x megacore: make sure both TensorCores get work ----
    Mp = _round_up(M, tm)
    if (Mp // tm) * (Np // tn) < 2 and tm >= 16 and (tm // 2) % 8 == 0:
        tm //= 2
    Mp = _round_up(M, tm)
    Kp = K if not k_tiled else _round_up(K, tk)

    # ---- Cast to bf16; pad only when actually needed (shapes are static) ----
    x_c = x2d if x2d.dtype == compute_dtype else x2d.astype(compute_dtype)
    w_c = weight if weight.dtype == compute_dtype else weight.astype(compute_dtype)
    b_c = bias.astype(jnp.float32).reshape(1, N)

    if Mp > M or Kp > K:
        x_c = jnp.pad(x_c, ((0, Mp - M), (0, Kp - K)))
    if Kp > K or Np > N:
        w_c = jnp.pad(w_c, ((0, Kp - K), (0, Np - N)))
    if Np > N:
        b_c = jnp.pad(b_c, ((0, 0), (0, Np - N)))

    n_i, n_j = Mp // tm, Np // tn

    if k_tiled:
        grid = (n_i, n_j, Kp // tk)
        in_specs = [
            pl.BlockSpec((tm, tk), lambda i, j, k: (i, k)),    # x tile
            pl.BlockSpec((tk, tn), lambda i, j, k: (k, j)),    # W tile
            pl.BlockSpec((1, tn), lambda i, j, k: (0, j)),     # bias row
        ]
        out_specs = pl.BlockSpec((tm, tn), lambda i, j, k: (i, j))
        scratch_shapes = [pltpu.VMEM((tm, tn), jnp.float32)]
        kernel = _linear_relu_kernel_ktiled
        dims = ("parallel", "parallel", "arbitrary")
        x_bytes = Mp * Kp * csize * n_j
        w_bytes = Kp * Np * csize * n_i
    else:
        grid = (n_i, n_j)
        in_specs = [
            pl.BlockSpec((tm, Kp), lambda i, j: (i, 0)),       # x tile (full K)
            pl.BlockSpec((Kp, tn), lambda i, j: (0, j)),       # resident W slab
            pl.BlockSpec((1, tn), lambda i, j: (0, j)),        # bias row
        ]
        out_specs = pl.BlockSpec((tm, tn), lambda i, j: (i, j))
        scratch_shapes = []
        kernel = _linear_relu_kernel_fused
        dims = ("parallel", "parallel")
        x_bytes = Mp * Kp * csize                              # x streams once
        w_bytes = Kp * Np * csize * (n_i if n_j > 1 else 1)    # W resident if n_j == 1

    vmem_limit = int(min(budget, max(32 * 1024 * 1024, 2 * tile_bytes)))

    cost = pl.CostEstimate(
        flops=2 * Mp * Np * Kp,
        transcendentals=0,
        bytes_accessed=int(x_bytes + w_bytes + Np * 4 + Mp * Np * out_isz),
    )

    # TODO(synk): optional v7x fp8 (e4m3 + per-tile scale) weight path would halve
    # weight HBM traffic and double MXU rate again if accuracy allows.
    out_p = pl.pallas_call(
        kernel,
        out_shape=jax.ShapeDtypeStruct((Mp, Np), out_dtype),
        grid=grid,
        in_specs=in_specs,
        out_specs=out_specs,
        scratch_shapes=scratch_shapes,
        compiler_params=pltpu.CompilerParams(
            dimension_semantics=dims,
            vmem_limit_bytes=vmem_limit,
        ),
        cost_estimate=cost,
    )(x_c, w_c, b_c)

    out = out_p
    if Mp > M or Np > N:
        out = out[:M, :N]
    return out.reshape(bz, seq_len, N)


# --------------------------------------------------------------------------
# References & test
# --------------------------------------------------------------------------
def _reference(x, weight, bias):
    """Plain f32 reference of the PyTorch forward."""
    bz, seq_len, k = x.shape
    y = jnp.maximum(x.reshape(-1, k) @ weight + bias, 0.0)
    return y.reshape(bz, seq_len, -1)


def _reference_bf16(x, weight, bias):
    """Reference with the same bf16 input quantization / f32 accumulation as the kernel."""
    bz, seq_len, k = x.shape
    xq = x.reshape(-1, k).astype(jnp.bfloat16).astype(jnp.float32)
    wq = weight.astype(jnp.bfloat16).astype(jnp.float32)
    y = jnp.matmul(xq, wq, precision=jax.lax.Precision.HIGHEST) + bias
    return jnp.maximum(y, 0.0).reshape(bz, seq_len, -1)


if __name__ == "__main__":
    key = jax.random.PRNGKey(0)
    kx, kw, kb, k2x, k2w, k2b = jax.random.split(key, 6)

    # --- Small shapes consistent with the module's forward (bz, seq, in) ---
    bz, seq_len, input_size, output_size = 2, 8, 32, 32
    x = jax.random.normal(kx, (bz, seq_len, input_size), dtype=jnp.float32)
    weight = jax.random.normal(kw, (input_size, output_size), dtype=jnp.float32)
    bias = jax.random.normal(kb, (output_size,), dtype=jnp.float32)

    out = linear_forward(x, weight, bias)
    jax.block_until_ready(out)
    assert out.shape == (bz, seq_len, output_size)
    assert jnp.allclose(out, _reference_bf16(x, weight, bias), atol=1e-2, rtol=1e-2)
    assert jnp.allclose(out, _reference(x, weight, bias), atol=1e-1, rtol=5e-2)

    # --- Larger shapes: resident-weight single-K-block path, 2-tile M grid ---
    bz2, seq2, in2, out2 = 2, 256, 1024, 256
    x2 = jax.random.normal(k2x, (bz2, seq2, in2), dtype=jnp.float32)
    w2 = jax.random.normal(k2w, (in2, out2), dtype=jnp.float32)
    b2 = jax.random.normal(k2b, (out2,), dtype=jnp.float32)

    y2 = linear_forward(x2, w2, b2)
    jax.block_until_ready(y2)
    assert y2.shape == (bz2, seq2, out2)
    assert jnp.allclose(y2, _reference_bf16(x2, w2, b2), atol=5e-2, rtol=1e-2)
    assert jnp.allclose(y2, _reference(x2, w2, b2), atol=5e-1, rtol=5e-2)

    print("KERNEL_OK")
</pallas_src>

<mosaic_0001>
module attributes {stable_mosaic.version = 11 : i64} {
  func.func @_linear_relu_kernel_fused(%arg0: i32, %arg1: i32, %arg2: memref<8x32xbf16, #tpu.memory_space<vmem>>, %arg3: memref<32x32xbf16, #tpu.memory_space<vmem>>, %arg4: memref<1x32xf32, #tpu.memory_space<vmem>>, %arg5: memref<8x32xf32, #tpu.memory_space<vmem>>) attributes {dimension_semantics = [#tpu.dimension_semantics<parallel>, #tpu.dimension_semantics<parallel>], iteration_bounds = array<i64: 2, 1>, scalar_prefetch = 0 : i64, scratch_operands = 0 : i64, tpu.core_type = #tpu.core_type<tc>, window_params = [{transform_indices = @transform_0, window_bounds = array<i64: 8, 32>}, {transform_indices = @transform_1, window_bounds = array<i64: 32, 32>}, {transform_indices = @transform_2, window_bounds = array<i64: 1, 32>}, {transform_indices = @transform_3, window_bounds = array<i64: 8, 32>}]} {
    %c0 = arith.constant 0 : index
    %c0_0 = arith.constant 0 : index
    %0 = vector.load %arg2[%c0, %c0_0] : memref<8x32xbf16, #tpu.memory_space<vmem>>, vector<8x32xbf16>
    %c0_1 = arith.constant 0 : index
    %c0_2 = arith.constant 0 : index
    %1 = vector.load %arg3[%c0_1, %c0_2] : memref<32x32xbf16, #tpu.memory_space<vmem>>, vector<32x32xbf16>
    %cst = arith.constant dense<0.000000e+00> : vector<8x32xf32>
    %2 = tpu.matmul %0, %1, %cst {dimension_numbers = #tpu.dot_dimension_numbers<[1], [0], [0], [1], [0, 0, 1, 1], [], []>} : vector<8x32xbf16>, vector<32x32xbf16>, vector<8x32xf32> -> vector<8x32xf32>
    %c0_3 = arith.constant 0 : index
    %c0_4 = arith.constant 0 : index
    %3 = vector.load %arg4[%c0_3, %c0_4] : memref<1x32xf32, #tpu.memory_space<vmem>>, vector<1x32xf32>
    %4 = vector.broadcast %3 : vector<1x32xf32> to vector<8x32xf32>
    %5 = arith.addf %2, %4 : vector<8x32xf32>
    %cst_5 = arith.constant 0.000000e+00 : f32
    %6 = vector.broadcast %cst_5 : f32 to vector<8x32xf32>
    %7 = arith.maximumf %5, %6 : vector<8x32xf32>
    %c0_6 = arith.constant 0 : index
    %c0_7 = arith.constant 0 : index
    %8 = vector.load %arg5[%c0_6, %c0_7] : memref<8x32xf32, #tpu.memory_space<vmem>>, vector<8x32xf32>
    tpu.vector_store %arg5[%c0_6, %c0_7], %7 {strides = array<i32>} : memref<8x32xf32, #tpu.memory_space<vmem>>, vector<8x32xf32>,
    return
  }
  func.func @transform_0(%arg0: i32, %arg1: i32) -> (i32, i32) {
    %c0_i32 = arith.constant 0 : i32
    %c0_i32_0 = arith.constant 0 : i32
    return %arg0, %c0_i32 : i32, i32
  }
  func.func @transform_1(%arg0: i32, %arg1: i32) -> (i32, i32) {
    %c0_i32 = arith.constant 0 : i32
    %c0_i32_0 = arith.constant 0 : i32
    return %c0_i32, %arg1 : i32, i32
  }
  func.func @transform_2(%arg0: i32, %arg1: i32) -> (i32, i32) {
    %c0_i32 = arith.constant 0 : i32
    %c0_i32_0 = arith.constant 0 : i32
    return %c0_i32, %arg1 : i32, i32
  }
  func.func @transform_3(%arg0: i32, %arg1: i32) -> (i32, i32) {
    %c0_i32 = arith.constant 0 : i32
    return %arg0, %arg1 : i32, i32
  }
}

</mosaic_0001>

<llo_original>
// kernel: linear_forward.1
$region0: #{linear_forward.1}
  #allocation0 [shape = 'u32[]', space=smem, size = 0x4, offset = 0x4, fixed_abs, tag = 'smem constant byte address 0x4 - core index']
  #allocation1 [shape = 'u32[144,128]{1,0:T(1,128)}', space=vmem, size = 0x12000, scoped, tag = 'internal scratch']
  %s0 = inlined_call_operand.vmem [shape: bf16[16,32], index: 0, kind: input, shape index: {}]
  %s1 = inlined_call_operand.vmem [shape: bf16[32,32], index: 1, kind: input, shape index: {}]
  %s2 = inlined_call_operand.vmem [shape: f32[1,32], index: 2, kind: input, shape index: {}]
  %s3 = inlined_call_operand.hbm [shape: f32[16,32], index: 3, kind: output, shape index: {}]
  %s4 = sld [smem:[#allocation0]]
  $region45: #{linear_forward.1} parent=0
    _
  %s6 = ssub.s32 1, %s4
  %s7 = scalar_select 0, %s6, %s4
  $region1: #{linear_forward.1} parent=0
    #allocation2 [shape = 'u8[8192]{0}', space=vmem, size = 0x2000, scoped, tag = 'output window, operand 0']
    #allocation3 [shape = 's32[2]{0}', space=sflag, size = 0x8, scoped, tag = 'scoped memory for linear_forward.1']
    %8 = vsyncpa [#allocation3], 0
    %s9 = scalar_lea.sflag [#allocation3], 1
    %10 = vsyncpa %s9, 0
    loop: start=0, step=1, limit=4
    $region2: #{linear_forward.1} parent=1 // loop_pre_header
      _
    $region3: #{linear_forward.1} parent=1 // loop_header
      %s12 = sphi 0, %s16
      %p13 = scmp.ge.s32.totalorder %s12, 4
      %s19 = sphi 0, %s31
      %s20 = sphi 0, %s27
      %s21 = sphi 0, %s19
      %s22 = sphi 0, %s20
      %s23 = sphi 0, %s21
      %s24 = sphi 0, %s22
      %s34 = sphi 0, %s36
      %s37 = sphi 0, %s34
      %s38 = sphi 0, %s37
      %s54 = sphi 0, %s38
      %s60 = sphi 0, %s62
      %s63 = sphi 0, %s60
      %s64 = sphi 0, %s63
      %s80 = sphi 0, %s64
      %s86 = sphi 0, %s88
      %s89 = sphi 0, %s86
      %s90 = sphi 0, %s89
      %s106 = sphi 0, %s90
      %s114 = sphi 0, %s116
      %s117 = sphi 0, %s114
      %s118 = sphi 0, %s117
      %s134 = sphi 0, %s118
    $region4: #{linear_forward.1} parent=1 // loop_header_branch
      %15 = sbr.rel (%p13) target = $region8
    $region5: #{linear_forward.1} parent=1 // loop_body
      %s17 = ssub.s32 %s12, 1
      %s18 = ssub.s32 %s12, 2
      %s25 = sadd.s32 1, %s20
      %p26 = scmp.ge.s32.totalorder %s25, 1
      %s27 = scalar_select %p26, 0, %s25
      %s28 = sadd.s32 1, %s19
      %s29 = scalar_select %p26, %s28, %s19
      %p30 = scmp.ge.s32.totalorder %s29, 2
      %s31 = scalar_select %p30, 0, %s29
      %s32 = ssub.s32 %s19, %s31
      %p33 = scmp.eq.s32.totalorder %s32, 0
      %s35 = sadd.s32 %s34, 1
      %s36 = scalar_select %p33, %s34, %s35
      %p39 = pneg %p33
      %p40 = scmp.eq.s32.totalorder %s12, 1
      %p41 = por %p39, %p40
      %p42 = scmp.ne.s32.totalorder %s34, %s37
      %p43 = scmp.eq.s32.totalorder %s12, 0
      %p44 = por %p42, %p43
      %p45 = scmp.ne.s32.totalorder %s34, %s37
      %p46 = scmp.eq.s32.totalorder %s17, 1
      %p47 = por %p45, %p46
      %p48 = scmp.ne.s32.totalorder %s37, %s38
      %p49 = scmp.eq.s32.totalorder %s17, 0
      %p50 = por %p48, %p49
      %p51 = scmp.ne.s32.totalorder %s37, %s38
      %p52 = scmp.eq.s32.totalorder %s18, 1
      %p53 = por %p51, %p52
      %p55 = scmp.ne.s32.totalorder %s38, %s54
      %p56 = scmp.eq.s32.totalorder %s18, 0
      %p57 = por %p55, %p56
      %s58 = ssub.s32 %s20, %s27
      %p59 = scmp.eq.s32.totalorder %s58, 0
      %s61 = sadd.s32 %s60, 1
      %s62 = scalar_select %p59, %s60, %s61
      %p65 = pneg %p59
      %p66 = scmp.eq.s32.totalorder %s12, 1
      %p67 = por %p65, %p66
      %p68 = scmp.ne.s32.totalorder %s60, %s63
      %p69 = scmp.eq.s32.totalorder %s12, 0
      %p70 = por %p68, %p69
      %p71 = scmp.ne.s32.totalorder %s60, %s63
      %p72 = scmp.eq.s32.totalorder %s17, 1
      %p73 = por %p71, %p72
      %p74 = scmp.ne.s32.totalorder %s63, %s64
      %p75 = scmp.eq.s32.totalorder %s17, 0
      %p76 = por %p74, %p75
      %p77 = scmp.ne.s32.totalorder %s63, %s64
      %p78 = scmp.eq.s32.totalorder %s18, 1
      %p79 = por %p77, %p78
      %p81 = scmp.ne.s32.totalorder %s64, %s80
      %p82 = scmp.eq.s32.totalorder %s18, 0
      %p83 = por %p81, %p82
      %s84 = ssub.s32 %s20, %s27
      %p85 = scmp.eq.s32.totalorder %s84, 0
      %s87 = sadd.s32 %s86, 1
      %s88 = scalar_select %p85, %s86, %s87
      %p91 = pneg %p85
      %p92 = scmp.eq.s32.totalorder %s12, 1
      %p93 = por %p91, %p92
      %p94 = scmp.ne.s32.totalorder %s86, %s89
      %p95 = scmp.eq.s32.totalorder %s12, 0
      %p96 = por %p94, %p95
      %p97 = scmp.ne.s32.totalorder %s86, %s89
      %p98 = scmp.eq.s32.totalorder %s17, 1
      %p99 = por %p97, %p98
      %p100 = scmp.ne.s32.totalorder %s89, %s90
      %p101 = scmp.eq.s32.totalorder %s17, 0
      %p102 = por %p100, %p101
      %p103 = scmp.ne.s32.totalorder %s89, %s90
      %p104 = scmp.eq.s32.totalorder %s18, 1
      %p105 = por %p103, %p104
      %p107 = scmp.ne.s32.totalorder %s90, %s106
      %p108 = scmp.eq.s32.totalorder %s18, 0
      %p109 = por %p107, %p108
      %s110 = ssub.s32 %s19, %s31
      %s111 = ssub.s32 %s20, %s27
      %s112 = sor.u32 %s110, %s111
      %p113 = scmp.eq.s32.totalorder %s112, 0
      %s115 = sadd.s32 %s114, 1
      %s116 = scalar_select %p113, %s114, %s115
      %p119 = pneg %p113
      %p120 = scmp.eq.s32.totalorder %s12, 1
      %p121 = por %p119, %p120
      %p122 = scmp.ne.s32.totalorder %s114, %s117
      %p123 = scmp.eq.s32.totalorder %s12, 0
      %p124 = por %p122, %p123
      %p125 = scmp.ne.s32.totalorder %s114, %s117
      %p126 = scmp.eq.s32.totalorder %s17, 1
      %p127 = por %p125, %p126
      %p128 = scmp.ne.s32.totalorder %s117, %s118
      %p129 = scmp.eq.s32.totalorder %s17, 0
      %p130 = por %p128, %p129
      %p131 = scmp.ne.s32.totalorder %s117, %s118
      %p132 = scmp.eq.s32.totalorder %s18, 1
      %p133 = por %p131, %p132
      %p135 = scmp.ne.s32.totalorder %s118, %s134
      %p136 = scmp.eq.s32.totalorder %s18, 0
      %p137 = por %p135, %p136
      %p138 = scmp.le.s32.totalorder 1, %s12
      %p139 = scmp.lt.s32.totalorder %s12, 3
      %p140 = pnand %p138, %p139
      %p141 = pneg %p140
      // Predicated region
      $region9: #{linear_forward.1} parent=5 // pred_check
        _
      $region10: #{linear_forward.1} parent=5 // pred_check_branch
        %143 = sbr.rel (%p140) target = $region12
      $region11: #{linear_forward.1} parent=5 // pred_region
        %s144 = ssub.s32 %s12, 1
        // Predicated region
        $region13: #{linear_forward.1} parent=11 // pred_check
          %p145 = pneg %p76
        $region14: #{linear_forward.1} parent=11 // pred_check_branch
          %147 = sbr.rel (%p145) target = $region16
        $region15: #{linear_forward.1} parent=11 // pred_region
          %p148 = scmp.lt.s32.totalorder %s22, 0
          %s149 = scalar_select %p148, %s22, 0
          %s150 = smul.addr %s149, 4
          %s151 = scalar_lea.vmem %s1, %s150
        $region16: #{linear_forward.1} parent=11 // pred_fallthru
          _
        // Predicated region
        $region17: #{linear_forward.1} parent=11 // pred_check
          %p152 = pneg %p102
        $region18: #{linear_forward.1} parent=11 // pred_check_branch
          %154 = sbr.rel (%p152) target = $region20
        $region19: #{linear_forward.1} parent=11 // pred_region
          %p155 = scmp.lt.s32.totalorder %s22, 0
          %s156 = scalar_select %p155, %s22, 0
          %s157 = scalar_lea.vmem %s2, %s156
        $region20: #{linear_forward.1} parent=11 // pred_fallthru
          _
      $region12: #{linear_forward.1} parent=5 // pred_fallthru
        _
      %p158 = scmp.lt.s32.totalorder %s12, 2
      // Predicated region
      $region21: #{linear_forward.1} parent=5 // pred_check
        %p159 = pneg %p158
      $region22: #{linear_forward.1} parent=5 // pred_check_branch
        %161 = sbr.rel (%p159) target = $region24
      $region23: #{linear_forward.1} parent=5 // pred_region
        // Predicated region
        $region25: #{linear_forward.1} parent=23 // pred_check
          %p162 = pneg %p44
        $region26: #{linear_forward.1} parent=23 // pred_check_branch
          %164 = sbr.rel (%p162) target = $region28
        $region27: #{linear_forward.1} parent=23 // pred_region
          %p165 = scmp.lt.s32.totalorder %s19, 1
          %s166 = scalar_select %p165, %s19, 1
          %s167 = smul.addr %s166, 4
          %s168 = scalar_lea.vmem %s0, %s167
        $region28: #{linear_forward.1} parent=23 // pred_fallthru
          _
      $region24: #{linear_forward.1} parent=5 // pred_fallthru
        _
      %p169 = scmp.le.s32.totalorder 1, %s12
      %p170 = scmp.lt.s32.totalorder %s12, 3
      %p171 = pnand %p169, %p170
      %p172 = pneg %p171
      // Predicated region
      $region29: #{linear_forward.1} parent=5 // pred_check
        _
      $region30: #{linear_forward.1} parent=5 // pred_check_branch
        %174 = sbr.rel (%p171) target = $region32
      $region31: #{linear_forward.1} parent=5 // pred_region
        %s175 = ssub.s32 %s12, 1
        %p176 = scmp.lt.s32.totalorder %s21, 1
        %s177 = scalar_select %p176, %s21, 1
        %s178 = smul.addr %s177, 4
        %s179 = scalar_lea.vmem %s0, %s178
        %p180 = pneg %p50
        %p181 = pneg %p47
        %p182 = scmp.lt.s32.totalorder %s22, 0
        %s183 = scalar_select %p182, %s22, 0
        %s184 = smul.addr %s183, 4
        %s185 = scalar_lea.vmem %s1, %s184
        %p186 = pneg %p76
        %p187 = pneg %p73
        %p188 = scmp.lt.s32.totalorder %s22, 0
        %s189 = scalar_select %p188, %s22, 0
        %s190 = scalar_lea.vmem %s2, %s189
        %p191 = pneg %p102
        %p192 = pneg %p99
        %p193 = pneg %p130
        %p194 = pneg %p127
        %s195 = sand.u32 %s117, 1
        %s196 = scalar_lea.sflag [#allocation3], %s195
        %s197 = sand.u32 %s117, 1
        %s198 = smul.addr %s197, 8
        %s199 = scalar_lea.vmem [#allocation2], %s198
        %p200 = scmp.lt.s32.totalorder %s21, 1
        %s201 = scalar_select %p200, %s21, 1
        %s202 = smul.addr %s201, 4
        %s203 = scalar_lea.vmem %s0, %s202
        %p204 = scmp.lt.s32.totalorder %s22, 0
        %s205 = scalar_select %p204, %s22, 0
        %s206 = smul.addr %s205, 4
        %s207 = scalar_lea.vmem %s1, %s206
        %p208 = scmp.lt.s32.totalorder %s22, 0
        %s209 = scalar_select %p208, %s22, 0
        %s210 = scalar_lea.vmem %s2, %s209
        %v212 = vld [vmem:[%s203] sm:$0xf]
        %v213 = vld [vmem:[%s207] sm:$0xf]
        %v214 = vld [vmem:[%s207 + $0x4] sm:$0xf]
        %v215 = vld [vmem:[%s207 + $0x8] sm:$0xf]
        %v216 = vld [vmem:[%s207 + $0xc] sm:$0xf]
        %v217 = vld [vmem:[%s210] sm:$0x1]
        %v219 = vlaneseq
        %v220 = vshrl.u32 %v219, 7
        %v221 = vsub.s32 0, %v220
        %v222 = vrot.slane %v217, %v221
        %v228 = vunpack.c.l.b16 %v213
        %v229 = vunpack.c.l.b16 %v214
        %v230 = vunpack.c.l.b16 %v215
        %v231 = vunpack.c.l.b16 %v216
        %v232 = vpack.c.b16 %v229, %v228
        %v233 = vpack.c.b16 %v231, %v230
        %vm236 = vcmask 261120
        %v238 = vsel %vm236, %v212, 0
        %240 = vmatprep.subr.bf16.mxu0 0
        %241 = vmatpush1.bf16.msra.mxu0 0
        %242 = vmatprep.subr.bf16.mxu0 0
        %243 = vmatpush1.bf16.msra.mxu0 0
        %244 = vmatprep.subr.bf16.mxu0 0
        %245 = vmatpush1.bf16.msra.mxu0 0
        %246 = vmatprep.subr.bf16.mxu0 0
        %247 = vmatpush1.bf16.msra.mxu0 0
        %248 = vmatprep.subr.bf16.mxu0 0
        %249 = vmatpush1.bf16.msra.mxu0 0
        %250 = vmatprep.subr.bf16.mxu0 0
        %251 = vmatpush1.bf16.msra.mxu0 0
        %252 = vmatprep.subr.bf16.mxu0 0
        %253 = vmatpush1.bf16.msra.mxu0 %v233
        %254 = vmatprep.subr.bf16.mxu0 0
        %255 = vmatpush1.bf16.msra.mxu0 %v232
        %256 = vmatprep.subr.bf16.mxu0 0
        %257 = vmatpush2.bf16.msra.mxu0 0
        %258 = vmatprep.subr.bf16.mxu0 0
        %259 = vmatpush2.bf16.msra.mxu0 0
        %260 = vmatprep.subr.bf16.mxu0 0
        %261 = vmatpush2.bf16.msra.mxu0 0
        %262 = vmatprep.subr.bf16.mxu0 0
        %263 = vmatpush2.bf16.msra.mxu0 0
        %264 = vmatprep.subr.bf16.mxu0 0
        %265 = vmatpush2.bf16.msra.mxu0 0
        %266 = vmatprep.subr.bf16.mxu0 0
        %267 = vmatpush2.bf16.msra.mxu0 0
        %268 = vmatprep.subr.bf16.mxu0 0
        %269 = vmatpush2.bf16.msra.mxu0 0
        %270 = vmatprep.subr.bf16.mxu0 0
        %271 = vmatpush2.bf16.msra.mxu0 0
        %272 = vmatprep.mubr.bf16.mxu0 0
        %273 = vmatmul.mubr.bf16.gmra.mxu0 %v238
        %v274 = vpop.f32.mrf.mxu0
        %v275 = vadd.f32 %v222, %v274
        %v276 = vpop.f32.mrf.mxu0
        %v277 = vpop.f32.mrf.mxu0
        %v278 = vpop.f32.mrf.mxu0
        %279 = vdwg.mxu0
        %v280 = vmax.f32 %v275, 0.0
        %281 = vst.msk [vmem:[%s199] sm:$0xff] %vm236, %v280
        %s282 = sand.u32 %s117, 1
        %s283 = scalar_lea.sflag [#allocation3], %s282
        %s284 = sand.u32 %s117, 1
        %s285 = smul.addr %s284, 8
        %s286 = scalar_lea.vmem [#allocation2], %s285
        // Predicated region
        $region33: #{linear_forward.1} parent=31 // pred_check
          %p287 = pneg %p127
        $region34: #{linear_forward.1} parent=31 // pred_check_branch
          %289 = sbr.rel (%p287) target = $region36
        $region35: #{linear_forward.1} parent=31 // pred_region
          %s291 = ssub.s32 128, 128
          %292 = vsyncadd %s283, %s291
          %s293 = sadd.s32 %s22, %s21
          %s294 = smul.addr %s293, 128
          %s295 = scalar_lea.hbm %s3, %s294
          %s297 = sshll.u32 %s286, 4
          %s298 = int_to_ptr.vmem [resolvable:$true] %s297
          %300 = dma.vmem_to_hbm [thread:$0]  %s298, 128, %s295, %s283
        $region36: #{linear_forward.1} parent=31 // pred_fallthru
          _
      $region32: #{linear_forward.1} parent=5 // pred_fallthru
        _
      %p301 = scmp.le.s32.totalorder 2, %s12
      // Predicated region
      $region37: #{linear_forward.1} parent=5 // pred_check
        %p302 = pneg %p301
      $region38: #{linear_forward.1} parent=5 // pred_check_branch
        %304 = sbr.rel (%p302) target = $region40
      $region39: #{linear_forward.1} parent=5 // pred_region
        %s305 = ssub.s32 %s12, 2
        // Predicated region
        $region41: #{linear_forward.1} parent=39 // pred_check
          %p306 = pneg %p133
        $region42: #{linear_forward.1} parent=39 // pred_check_branch
          %308 = sbr.rel (%p306) target = $region44
        $region43: #{linear_forward.1} parent=39 // pred_region
          %s309 = sand.u32 %s118, 1
          %s310 = scalar_lea.sflag [#allocation3], %s309
          %s311 = sand.u32 %s118, 1
          %s312 = smul.addr %s311, 8
          %s313 = scalar_lea.vmem [#allocation2], %s312
          %314 = dma.done %s310, 128
        $region44: #{linear_forward.1} parent=39 // pred_fallthru
          _
      $region40: #{linear_forward.1} parent=5 // pred_fallthru
        _
    $region6: #{linear_forward.1} parent=1 // loop_footer
      %s16 = sadd.s32 1, %s12
    $region7: #{linear_forward.1} parent=1 // loop_footer_branch
      %11 = sbr.rel target = $region3
    $region8: #{linear_forward.1} parent=1 // loop_exit
      _
    %315 = vsyncpa [#allocation3], 1
    %s316 = scalar_lea.sflag [#allocation3], 1
    %317 = vsyncpa %s316, 1

</llo_original>
